<compile_context>
chip_gen: v7x
topology: tpu7x:2x2x1
jax: 0.10.0
libtpu: 0.0.40
codegen_flags: <defaults>
</compile_context>

<pallas_src>
import math

import jax
import jax.numpy as jnp
from jax.experimental import pallas as pl
from jax.experimental.pallas import tpu as pltpu


def _round_up(x: int, m: int) -> int:
    return ((x + m - 1) // m) * m


def _make_cosface_kernel(s: float, m: float, tc: int):
    sm = s * m

    def kernel(x_ref, w_ref, lbl_ref, o_ref, acc_ref, xsq_ref, wsq_ref):
        j = pl.program_id(1)
        k = pl.program_id(2)
        nk = pl.num_programs(2)

        @pl.when(k == 0)
        def _():
            acc_ref[...] = jnp.zeros_like(acc_ref)
            xsq_ref[...] = jnp.zeros_like(xsq_ref)
            wsq_ref[...] = jnp.zeros_like(wsq_ref)

        x = x_ref[...]                       # (TB, TK)  (f32 or bf16)
        w = w_ref[...]                       # (TK, TC)

        # Partial un-normalized logits on the MXU with f32 accumulation.
        acc_ref[...] += jnp.dot(x, w, preferred_element_type=jnp.float32)

        # Partial squared norms (rank-1 normalization applied in the epilogue).
        xf = x.astype(jnp.float32)
        wf = w.astype(jnp.float32)
        xsq_ref[...] += jnp.sum(xf * xf, axis=1, keepdims=True)   # (TB, 1)
        wsq_ref[...] += jnp.sum(wf * wf, axis=0, keepdims=True)   # (1, TC)

        @pl.when(k == nk - 1)
        def _():
            # F.normalize eps: 1/max(||v||, 1e-12) == rsqrt(max(sum v^2, 1e-24)).
            # (Also guards zero-padded tail rows/cols.)
            inv_x = jax.lax.rsqrt(jnp.maximum(xsq_ref[...], 1e-24))  # (TB, 1)
            inv_w = jax.lax.rsqrt(jnp.maximum(wsq_ref[...], 1e-24))  # (1, TC)
            cosine = acc_ref[...] * inv_x * inv_w                    # (TB, TC)

            labels = lbl_ref[...]                                    # (TB, 1) int32
            classes = j * tc + jax.lax.broadcasted_iota(
                jnp.int32, cosine.shape, 1)                          # (TB, TC)
            one_hot = (classes == labels).astype(jnp.float32)

            # s * (one_hot*(cos-m) + (1-one_hot)*cos) == s*cos - (s*m)*one_hot
            o_ref[...] = (s * cosine - sm * one_hot).astype(o_ref.dtype)

    return kernel


def cosface_forward(x, weight, label, *, s=64.0, m=0.35,
                    tb=128, tc=256, tk=512):
    """x: (B, D), weight: (C, D), label: (B,) int -> (B, C) float32."""
    B, D = x.shape
    C, D2 = weight.shape
    assert D == D2, "in_features mismatch"

    # MXU/lane-friendly tile sizes, capped at the (padded) problem size.
    TB = min(tb, _round_up(B, 8))
    TC = min(tc, _round_up(C, 128))
    TK = min(tk, _round_up(D, 128))

    Bp = _round_up(B, TB)
    Cp = _round_up(C, TC)
    Dp = _round_up(D, TK)

    # Weight consumed as (D, C): one transpose outside the hot loop (at init in
    # a real model), zero-padded so every tile is full.
    w_t = jnp.pad(weight.T, ((0, Dp - D), (0, Cp - C)))
    x_p = jnp.pad(x, ((0, Bp - B), (0, Dp - D)))
    lbl = jnp.pad(label.astype(jnp.int32), (0, Bp - B),
                  constant_values=-1).reshape(Bp, 1)

    kernel = _make_cosface_kernel(float(s), float(m), TC)

    out = pl.pallas_call(
        kernel,
        out_shape=jax.ShapeDtypeStruct((Bp, Cp), jnp.float32),
        grid_spec=pltpu.PrefetchScalarGridSpec(
            num_scalar_prefetch=0,
            grid=(Bp // TB, Cp // TC, Dp // TK),
            in_specs=[
                pl.BlockSpec((TB, TK), lambda i, j, k: (i, k)),   # x
                pl.BlockSpec((TK, TC), lambda i, j, k: (k, j)),   # W^T
                pl.BlockSpec((TB, 1), lambda i, j, k: (i, 0)),    # label
            ],
            out_specs=pl.BlockSpec((TB, TC), lambda i, j, k: (i, j)),
            scratch_shapes=[
                pltpu.VMEM((TB, TC), jnp.float32),   # dot accumulator
                pltpu.VMEM((TB, 1), jnp.float32),    # sum(x^2) per row
                pltpu.VMEM((1, TC), jnp.float32),    # sum(w^2) per class
            ],
        ),
        compiler_params=pltpu.CompilerParams(
            dimension_semantics=("parallel", "parallel", "arbitrary"),
            vmem_limit_bytes=32 * 1024 * 1024,
        ),
    )(x_p, w_t, lbl)

    return out[:B, :C]


def xavier_uniform(key, out_features, in_features):
    # nn.init.xavier_uniform_: U(-a, a), a = sqrt(6 / (fan_in + fan_out))
    a = math.sqrt(6.0 / (in_features + out_features))
    return jax.random.uniform(
        key, (out_features, in_features), jnp.float32, minval=-a, maxval=a)


if __name__ == "__main__":
    key = jax.random.PRNGKey(0)
    k_x, k_w, k_l = jax.random.split(key, 3)

    B = 8
    in_features = 256
    out_features = 300   # not a multiple of 128 -> exercises padded C tail

    x = jax.random.normal(k_x, (B, in_features), jnp.float32)
    weight = xavier_uniform(k_w, out_features, in_features)
    label = jax.random.randint(k_l, (B,), 0, out_features, jnp.int32)

    # Small tile sizes here purely to exercise the (B, C, K) tiling / class
    # offsets / K-reduction on a small example; defaults (128/256/512) are the
    # production choice.
    out = cosface_forward(x, weight, label, s=64.0, m=0.35, tb=8, tc=128, tk=128)
    out = jax.block_until_ready(out)

    # Pure-JAX reference (same math as the PyTorch module, device_id=None path).
    xn = x / jnp.maximum(jnp.linalg.norm(x, axis=1, keepdims=True), 1e-12)
    wn = weight / jnp.maximum(jnp.linalg.norm(weight, axis=1, keepdims=True), 1e-12)
    cosine = xn @ wn.T
    one_hot = jax.nn.one_hot(label, out_features, dtype=jnp.float32)
    ref = 64.0 * (cosine - 0.35 * one_hot)

    assert out.shape == (B, out_features)
    assert jnp.allclose(out, ref, atol=2e-3, rtol=2e-3), "mismatch vs reference"

    print("KERNEL_OK")
</pallas_src>

<mosaic_0001>
module attributes {stable_mosaic.version = 11 : i64} {
  func.func @kernel(%arg0: i32, %arg1: i32, %arg2: i32, %arg3: memref<8x128xf32, #tpu.memory_space<vmem>>, %arg4: memref<128x128xf32, #tpu.memory_space<vmem>>, %arg5: memref<8x1xi32, #tpu.memory_space<vmem>>, %arg6: memref<8x128xf32, #tpu.memory_space<vmem>>, %arg7: memref<8x128xf32, #tpu.memory_space<vmem>>, %arg8: memref<8x1xf32, #tpu.memory_space<vmem>>, %arg9: memref<1x128xf32, #tpu.memory_space<vmem>>) attributes {dimension_semantics = [#tpu.dimension_semantics<parallel>, #tpu.dimension_semantics<parallel>, #tpu.dimension_semantics<arbitrary>], iteration_bounds = array<i64: 1, 3, 2>, scalar_prefetch = 0 : i64, scratch_operands = 3 : i64, tpu.core_type = #tpu.core_type<tc>, window_params = [{transform_indices = @transform_0, window_bounds = array<i64: 8, 128>}, {transform_indices = @transform_1, window_bounds = array<i64: 128, 128>}, {transform_indices = @transform_2, window_bounds = array<i64: 8, 1>}, {transform_indices = @transform_3, window_bounds = array<i64: 8, 128>}]} {
    %c0_i32 = arith.constant 0 : i32
    %0 = arith.cmpi eq, %arg2, %c0_i32 : i32
    %1 = arith.extui %0 : i1 to i32
    %c0_i32_0 = arith.constant 0 : i32
    %2 = arith.cmpi ne, %1, %c0_i32_0 : i32
    scf.if %2 {
      %cst_19 = arith.constant 0.000000e+00 : f32
      %24 = vector.broadcast %cst_19 : f32 to vector<8x128xf32>
      %c0_20 = arith.constant 0 : index
      %c0_21 = arith.constant 0 : index
      %25 = vector.load %arg7[%c0_20, %c0_21] : memref<8x128xf32, #tpu.memory_space<vmem>>, vector<8x128xf32>
      tpu.vector_store %arg7[%c0_20, %c0_21], %24 {strides = array<i32>} : memref<8x128xf32, #tpu.memory_space<vmem>>, vector<8x128xf32>,
      %cst_22 = arith.constant 0.000000e+00 : f32
      %26 = vector.broadcast %cst_22 : f32 to vector<8x1xf32>
      %c0_23 = arith.constant 0 : index
      %c0_24 = arith.constant 0 : index
      %27 = vector.load %arg8[%c0_23, %c0_24] : memref<8x1xf32, #tpu.memory_space<vmem>>, vector<8x1xf32>
      tpu.vector_store %arg8[%c0_23, %c0_24], %26 {strides = array<i32>} : memref<8x1xf32, #tpu.memory_space<vmem>>, vector<8x1xf32>,
      %cst_25 = arith.constant 0.000000e+00 : f32
      %28 = vector.broadcast %cst_25 : f32 to vector<1x128xf32>
      %c0_26 = arith.constant 0 : index
      %c0_27 = arith.constant 0 : index
      %29 = vector.load %arg9[%c0_26, %c0_27] : memref<1x128xf32, #tpu.memory_space<vmem>>, vector<1x128xf32>
      tpu.vector_store %arg9[%c0_26, %c0_27], %28 {strides = array<i32>} : memref<1x128xf32, #tpu.memory_space<vmem>>, vector<1x128xf32>,
    } else {
    }
    %c0 = arith.constant 0 : index
    %c0_1 = arith.constant 0 : index
    %3 = vector.load %arg3[%c0, %c0_1] : memref<8x128xf32, #tpu.memory_space<vmem>>, vector<8x128xf32>
    %c0_2 = arith.constant 0 : index
    %c0_3 = arith.constant 0 : index
    %4 = vector.load %arg4[%c0_2, %c0_3] : memref<128x128xf32, #tpu.memory_space<vmem>>, vector<128x128xf32>
    %c0_4 = arith.constant 0 : index
    %c0_5 = arith.constant 0 : index
    %5 = vector.load %arg7[%c0_4, %c0_5] : memref<8x128xf32, #tpu.memory_space<vmem>>, vector<8x128xf32>
    %cst = arith.constant dense<0.000000e+00> : vector<8x128xf32>
    %6 = tpu.matmul %3, %4, %cst {dimension_numbers = #tpu.dot_dimension_numbers<[1], [0], [0], [1], [0, 0, 1, 1], [], []>} : vector<8x128xf32>, vector<128x128xf32>, vector<8x128xf32> -> vector<8x128xf32>
    %7 = arith.addf %5, %6 : vector<8x128xf32>
    %c0_6 = arith.constant 0 : index
    %c0_7 = arith.constant 0 : index
    %8 = vector.load %arg7[%c0_6, %c0_7] : memref<8x128xf32, #tpu.memory_space<vmem>>, vector<8x128xf32>
    tpu.vector_store %arg7[%c0_6, %c0_7], %7 {strides = array<i32>} : memref<8x128xf32, #tpu.memory_space<vmem>>, vector<8x128xf32>,
    %c0_8 = arith.constant 0 : index
    %c0_9 = arith.constant 0 : index
    %9 = vector.load %arg8[%c0_8, %c0_9] : memref<8x1xf32, #tpu.memory_space<vmem>>, vector<8x1xf32>
    %10 = arith.mulf %3, %3 : vector<8x128xf32>
    %cst_10 = arith.constant dense<0.000000e+00> : vector<8xf32>
    %11 = vector.multi_reduction <add>, %10, %cst_10 [1] : vector<8x128xf32> to vector<8xf32>
    %12 = vector.shape_cast %11 : vector<8xf32> to vector<8x1xf32>
    %13 = arith.addf %9, %12 : vector<8x1xf32>
    %c0_11 = arith.constant 0 : index
    %c0_12 = arith.constant 0 : index
    %14 = vector.load %arg8[%c0_11, %c0_12] : memref<8x1xf32, #tpu.memory_space<vmem>>, vector<8x1xf32>
    tpu.vector_store %arg8[%c0_11, %c0_12], %13 {strides = array<i32>} : memref<8x1xf32, #tpu.memory_space<vmem>>, vector<8x1xf32>,
    %c0_13 = arith.constant 0 : index
    %c0_14 = arith.constant 0 : index
    %15 = vector.load %arg9[%c0_13, %c0_14] : memref<1x128xf32, #tpu.memory_space<vmem>>, vector<1x128xf32>
    %16 = arith.mulf %4, %4 : vector<128x128xf32>
    %cst_15 = arith.constant dense<0.000000e+00> : vector<128xf32>
    %17 = vector.multi_reduction <add>, %16, %cst_15 [0] : vector<128x128xf32> to vector<128xf32>
    %18 = vector.shape_cast %17 : vector<128xf32> to vector<1x128xf32>
    %19 = arith.addf %15, %18 : vector<1x128xf32>
    %c0_16 = arith.constant 0 : index
    %c0_17 = arith.constant 0 : index
    %20 = vector.load %arg9[%c0_16, %c0_17] : memref<1x128xf32, #tpu.memory_space<vmem>>, vector<1x128xf32>
    tpu.vector_store %arg9[%c0_16, %c0_17], %19 {strides = array<i32>} : memref<1x128xf32, #tpu.memory_space<vmem>>, vector<1x128xf32>,
    %c1_i32 = arith.constant 1 : i32
    %21 = arith.cmpi eq, %arg2, %c1_i32 : i32
    %22 = arith.extui %21 : i1 to i32
    %c0_i32_18 = arith.constant 0 : i32
    %23 = arith.cmpi ne, %22, %c0_i32_18 : i32
    scf.if %23 {
      %c0_19 = arith.constant 0 : index
      %c0_20 = arith.constant 0 : index
      %24 = vector.load %arg8[%c0_19, %c0_20] : memref<8x1xf32, #tpu.memory_space<vmem>>, vector<8x1xf32>
      %cst_21 = arith.constant 1.000000e-24 : f32
      %25 = vector.broadcast %cst_21 : f32 to vector<8x1xf32>
      %26 = arith.maximumf %24, %25 : vector<8x1xf32>
      %27 = math.rsqrt %26 : vector<8x1xf32>
      %c0_22 = arith.constant 0 : index
      %c0_23 = arith.constant 0 : index
      %28 = vector.load %arg9[%c0_22, %c0_23] : memref<1x128xf32, #tpu.memory_space<vmem>>, vector<1x128xf32>
      %cst_24 = arith.constant 1.000000e-24 : f32
      %29 = vector.broadcast %cst_24 : f32 to vector<1x128xf32>
      %30 = arith.maximumf %28, %29 : vector<1x128xf32>
      %31 = math.rsqrt %30 : vector<1x128xf32>
      %c0_25 = arith.constant 0 : index
      %c0_26 = arith.constant 0 : index
      %32 = vector.load %arg7[%c0_25, %c0_26] : memref<8x128xf32, #tpu.memory_space<vmem>>, vector<8x128xf32>
      %33 = vector.broadcast %27 : vector<8x1xf32> to vector<8x128xf32>
      %34 = arith.mulf %32, %33 : vector<8x128xf32>
      %35 = vector.broadcast %31 : vector<1x128xf32> to vector<8x128xf32>
      %36 = arith.mulf %34, %35 : vector<8x128xf32>
      %c0_27 = arith.constant 0 : index
      %c0_28 = arith.constant 0 : index
      %37 = vector.load %arg5[%c0_27, %c0_28] : memref<8x1xi32, #tpu.memory_space<vmem>>, vector<8x1xi32>
      %c128_i32 = arith.constant 128 : i32
      %38 = arith.muli %arg1, %c128_i32 : i32
      %39 = tpu.iota {dimensions = array<i32: 1>} : vector<8x128xi32>
      %40 = vector.broadcast %38 : i32 to vector<8x128xi32>
      %41 = arith.addi %40, %39 : vector<8x128xi32>
      %42 = vector.broadcast %37 : vector<8x1xi32> to vector<8x128xi32>
      %43 = arith.cmpi eq, %41, %42 : vector<8x128xi32>
      %44 = arith.extui %43 : vector<8x128xi1> to vector<8x128xi32>
      %45 = arith.sitofp %44 : vector<8x128xi32> to vector<8x128xf32>
      %cst_29 = arith.constant 6.400000e+01 : f32
      %46 = vector.broadcast %cst_29 : f32 to vector<8x128xf32>
      %47 = arith.mulf %46, %36 : vector<8x128xf32>
      %cst_30 = arith.constant 2.240000e+01 : f32
      %48 = vector.broadcast %cst_30 : f32 to vector<8x128xf32>
      %49 = arith.mulf %48, %45 : vector<8x128xf32>
      %50 = arith.subf %47, %49 : vector<8x128xf32>
      %c0_31 = arith.constant 0 : index
      %c0_32 = arith.constant 0 : index
      %51 = vector.load %arg6[%c0_31, %c0_32] : memref<8x128xf32, #tpu.memory_space<vmem>>, vector<8x128xf32>
      tpu.vector_store %arg6[%c0_31, %c0_32], %50 {strides = array<i32>} : memref<8x128xf32, #tpu.memory_space<vmem>>, vector<8x128xf32>,
    } else {
    }
    return
  }
  func.func @transform_0(%arg0: i32, %arg1: i32, %arg2: i32) -> (i32, i32) {
    %c0_i32 = arith.constant 0 : i32
    return %arg0, %arg2 : i32, i32
  }
  func.func @transform_1(%arg0: i32, %arg1: i32, %arg2: i32) -> (i32, i32) {
    %c0_i32 = arith.constant 0 : i32
    return %arg2, %arg1 : i32, i32
  }
  func.func @transform_2(%arg0: i32, %arg1: i32, %arg2: i32) -> (i32, i32) {
    %c0_i32 = arith.constant 0 : i32
    %c0_i32_0 = arith.constant 0 : i32
    return %arg0, %c0_i32 : i32, i32
  }
  func.func @transform_3(%arg0: i32, %arg1: i32, %arg2: i32) -> (i32, i32) {
    %c0_i32 = arith.constant 0 : i32
    return %arg0, %arg1 : i32, i32
  }
}

</mosaic_0001>

<llo_original>
// kernel: tpu_custom_call.1
$region0: #{tpu_custom_call.1}
  #allocation0 [shape = 'u32[]', space=smem, size = 0x4, offset = 0x4, fixed_abs, tag = 'smem constant byte address 0x4 - core index']
  #allocation1 [shape = 'u32[144,128]{1,0:T(1,128)}', space=vmem, size = 0x12000, scoped, tag = 'internal scratch']
  #allocation2 [shape = 'f32[8,128]{1,0:T(8,128)}', space=vmem, size = 0x1000, scoped, tag = 'scratch operand']
  #allocation3 [shape = 'f32[8,1]{1,0:T(8,128)}', space=vmem, size = 0x1000, scoped, tag = 'scratch operand']
  #allocation4 [shape = 'f32[1,128]{1,0:T(1,128)}', space=vmem, size = 0x200, scoped, tag = 'scratch operand']
  %s0 = inlined_call_operand.hbm [shape: f32[8,256], index: 0, kind: input, shape index: {}]
  %s1 = inlined_call_operand.hbm [shape: f32[256,384], index: 1, kind: input, shape index: {}]
  %s2 = inlined_call_operand.vmem [shape: s32[8,1], index: 2, kind: input, shape index: {}]
  %s3 = inlined_call_operand.hbm [shape: f32[8,384], index: 3, kind: output, shape index: {}]
  %s4 = sld [smem:[#allocation0]]
  $region61: #{tpu_custom_call.1} parent=0
    _
  %s6 = ssub.s32 1, %s4
  %s7 = scalar_select 0, %s6, %s4
  $region1: #{tpu_custom_call.1} parent=0
    #allocation5 [shape = 'u8[8192]{0}', space=vmem, size = 0x2000, scoped, tag = 'input window, operand 0']
    #allocation6 [shape = 's32[2]{0}', space=sflag, size = 0x8, scoped, tag = 'scoped memory for tpu_custom_call.1']
    #allocation7 [shape = 's32[2]{0}', space=sflag, size = 0x8, scoped, tag = 'scoped memory for tpu_custom_call.1']
    #allocation8 [shape = 'u8[131072]{0}', space=vmem, size = 0x20000, scoped, tag = 'input window, operand 1']
    #allocation9 [shape = 's32[2]{0}', space=sflag, size = 0x8, scoped, tag = 'scoped memory for tpu_custom_call.1']
    #allocation10 [shape = 'u8[8192]{0}', space=vmem, size = 0x2000, scoped, tag = 'output window, operand 0']
    %8 = vsyncpa [#allocation6], 0
    %s9 = scalar_lea.sflag [#allocation6], 1
    %10 = vsyncpa %s9, 0
    %11 = vsyncpa [#allocation9], 0
    %s12 = scalar_lea.sflag [#allocation9], 1
    %13 = vsyncpa %s12, 0
    %14 = vsyncpa [#allocation7], 0
    %s15 = scalar_lea.sflag [#allocation7], 1
    %16 = vsyncpa %s15, 0
    loop: start=0, step=1, limit=8
    $region2: #{tpu_custom_call.1} parent=1 // loop_pre_header
      _
    $region3: #{tpu_custom_call.1} parent=1 // loop_header
      %s18 = sphi 0, %s22
      %p19 = scmp.ge.s32.totalorder %s18, 8
      %s25 = sphi 0, %s44
      %s26 = sphi 0, %s40
      %s27 = sphi 0, %s36
      %s28 = sphi 0, %s25
      %s29 = sphi 0, %s26
      %s30 = sphi 0, %s27
      %s31 = sphi 0, %s28
      %s32 = sphi 0, %s29
      %s33 = sphi 0, %s30
      %s49 = sphi 0, %s51
      %s52 = sphi 0, %s49
      %s53 = sphi 0, %s52
      %s69 = sphi 0, %s53
      %s77 = sphi 0, %s79
      %s80 = sphi 0, %s77
      %s81 = sphi 0, %s80
      %s97 = sphi 0, %s81
      %s103 = sphi 0, %s105
      %s106 = sphi 0, %s103
      %s107 = sphi 0, %s106
      %s123 = sphi 0, %s107
      %s131 = sphi 0, %s133
      %s134 = sphi 0, %s131
      %s135 = sphi 0, %s134
      %s151 = sphi 0, %s135
    $region4: #{tpu_custom_call.1} parent=1 // loop_header_branch
      %21 = sbr.rel (%p19) target = $region8
    $region5: #{tpu_custom_call.1} parent=1 // loop_body
      %s23 = ssub.s32 %s18, 1
      %s24 = ssub.s32 %s18, 2
      %s34 = sadd.s32 1, %s27
      %p35 = scmp.ge.s32.totalorder %s34, 2
      %s36 = scalar_select %p35, 0, %s34
      %s37 = sadd.s32 1, %s26
      %s38 = scalar_select %p35, %s37, %s26
      %p39 = scmp.ge.s32.totalorder %s38, 3
      %s40 = scalar_select %p39, 0, %s38
      %s41 = sadd.s32 1, %s25
      %s42 = scalar_select %p39, %s41, %s25
      %p43 = scmp.ge.s32.totalorder %s42, 1
      %s44 = scalar_select %p43, 0, %s42
      %s45 = ssub.s32 %s25, %s44
      %s46 = ssub.s32 %s27, %s36
      %s47 = sor.u32 %s45, %s46
      %p48 = scmp.eq.s32.totalorder %s47, 0
      %s50 = sadd.s32 %s49, 1
      %s51 = scalar_select %p48, %s49, %s50
      %p54 = pneg %p48
      %p55 = scmp.eq.s32.totalorder %s18, 5
      %p56 = por %p54, %p55
      %p57 = scmp.ne.s32.totalorder %s49, %s52
      %p58 = scmp.eq.s32.totalorder %s18, 0
      %p59 = por %p57, %p58
      %p60 = scmp.ne.s32.totalorder %s49, %s52
      %p61 = scmp.eq.s32.totalorder %s23, 5
      %p62 = por %p60, %p61
      %p63 = scmp.ne.s32.totalorder %s52, %s53
      %p64 = scmp.eq.s32.totalorder %s23, 0
      %p65 = por %p63, %p64
      %p66 = scmp.ne.s32.totalorder %s52, %s53
      %p67 = scmp.eq.s32.totalorder %s24, 5
      %p68 = por %p66, %p67
      %p70 = scmp.ne.s32.totalorder %s53, %s69
      %p71 = scmp.eq.s32.totalorder %s24, 0
      %p72 = por %p70, %p71
      %s73 = ssub.s32 %s27, %s36
      %s74 = ssub.s32 %s26, %s40
      %s75 = sor.u32 %s73, %s74
      %p76 = scmp.eq.s32.totalorder %s75, 0
      %s78 = sadd.s32 %s77, 1
      %s79 = scalar_select %p76, %s77, %s78
      %p82 = pneg %p76
      %p83 = scmp.eq.s32.totalorder %s18, 5
      %p84 = por %p82, %p83
      %p85 = scmp.ne.s32.totalorder %s77, %s80
      %p86 = scmp.eq.s32.totalorder %s18, 0
      %p87 = por %p85, %p86
      %p88 = scmp.ne.s32.totalorder %s77, %s80
      %p89 = scmp.eq.s32.totalorder %s23, 5
      %p90 = por %p88, %p89
      %p91 = scmp.ne.s32.totalorder %s80, %s81
      %p92 = scmp.eq.s32.totalorder %s23, 0
      %p93 = por %p91, %p92
      %p94 = scmp.ne.s32.totalorder %s80, %s81
      %p95 = scmp.eq.s32.totalorder %s24, 5
      %p96 = por %p94, %p95
      %p98 = scmp.ne.s32.totalorder %s81, %s97
      %p99 = scmp.eq.s32.totalorder %s24, 0
      %p100 = por %p98, %p99
      %s101 = ssub.s32 %s25, %s44
      %p102 = scmp.eq.s32.totalorder %s101, 0
      %s104 = sadd.s32 %s103, 1
      %s105 = scalar_select %p102, %s103, %s104
      %p108 = pneg %p102
      %p109 = scmp.eq.s32.totalorder %s18, 5
      %p110 = por %p108, %p109
      %p111 = scmp.ne.s32.totalorder %s103, %s106
      %p112 = scmp.eq.s32.totalorder %s18, 0
      %p113 = por %p111, %p112
      %p114 = scmp.ne.s32.totalorder %s103, %s106
      %p115 = scmp.eq.s32.totalorder %s23, 5
      %p116 = por %p114, %p115
      %p117 = scmp.ne.s32.totalorder %s106, %s107
      %p118 = scmp.eq.s32.totalorder %s23, 0
      %p119 = por %p117, %p118
      %p120 = scmp.ne.s32.totalorder %s106, %s107
      %p121 = scmp.eq.s32.totalorder %s24, 5
      %p122 = por %p120, %p121
      %p124 = scmp.ne.s32.totalorder %s107, %s123
      %p125 = scmp.eq.s32.totalorder %s24, 0
      %p126 = por %p124, %p125
      %s127 = ssub.s32 %s25, %s44
      %s128 = ssub.s32 %s26, %s40
      %s129 = sor.u32 %s127, %s128
      %p130 = scmp.eq.s32.totalorder %s129, 0
      %s132 = sadd.s32 %s131, 1
      %s133 = scalar_select %p130, %s131, %s132
      %p136 = pneg %p130
      %p137 = scmp.eq.s32.totalorder %s18, 5
      %p138 = por %p136, %p137
      %p139 = scmp.ne.s32.totalorder %s131, %s134
      %p140 = scmp.eq.s32.totalorder %s18, 0
      %p141 = por %p139, %p140
      %p142 = scmp.ne.s32.totalorder %s131, %s134
      %p143 = scmp.eq.s32.totalorder %s23, 5
      %p144 = por %p142, %p143
      %p145 = scmp.ne.s32.totalorder %s134, %s135
      %p146 = scmp.eq.s32.totalorder %s23, 0
      %p147 = por %p145, %p146
      %p148 = scmp.ne.s32.totalorder %s134, %s135
      %p149 = scmp.eq.s32.totalorder %s24, 5
      %p150 = por %p148, %p149
      %p152 = scmp.ne.s32.totalorder %s135, %s151
      %p153 = scmp.eq.s32.totalorder %s24, 0
      %p154 = por %p152, %p153
      %p155 = scmp.le.s32.totalorder 1, %s18
      %p156 = scmp.lt.s32.totalorder %s18, 7
      %p157 = pnand %p155, %p156
      %p158 = pneg %p157
      // Predicated region
      $region9: #{tpu_custom_call.1} parent=5 // pred_check
        _
      $region10: #{tpu_custom_call.1} parent=5 // pred_check_branch
        %160 = sbr.rel (%p157) target = $region12
      $region11: #{tpu_custom_call.1} parent=5 // pred_region
        %s161 = ssub.s32 %s18, 1
        // Predicated region
        $region13: #{tpu_custom_call.1} parent=11 // pred_check
          %p162 = pneg %p119
        $region14: #{tpu_custom_call.1} parent=11 // pred_check_branch
          %164 = sbr.rel (%p162) target = $region16
        $region15: #{tpu_custom_call.1} parent=11 // pred_region
          %p165 = scmp.lt.s32.totalorder %s28, 0
          %s166 = scalar_select %p165, %s28, 0
          %s167 = smul.addr %s166, 8
          %s168 = scalar_lea.vmem %s2, %s167
        $region16: #{tpu_custom_call.1} parent=11 // pred_fallthru
          _
      $region12: #{tpu_custom_call.1} parent=5 // pred_fallthru
        _
      %p169 = scmp.lt.s32.totalorder %s18, 6
      // Predicated region
      $region17: #{tpu_custom_call.1} parent=5 // pred_check
        %p170 = pneg %p169
      $region18: #{tpu_custom_call.1} parent=5 // pred_check_branch
        %172 = sbr.rel (%p170) target = $region20
      $region19: #{tpu_custom_call.1} parent=5 // pred_region
        // Predicated region
        $region21: #{tpu_custom_call.1} parent=19 // pred_check
          %p173 = pneg %p59
        $region22: #{tpu_custom_call.1} parent=19 // pred_check_branch
          %175 = sbr.rel (%p173) target = $region24
        $region23: #{tpu_custom_call.1} parent=19 // pred_region
          %s176 = sand.u32 %s49, 1
          %s177 = scalar_lea.sflag [#allocation6], %s176
          %s178 = sand.u32 %s49, 1
          %s179 = smul.addr %s178, 8
          %s180 = scalar_lea.vmem [#allocation5], %s179
          %s182 = ssub.s32 128, 128
          %183 = vsyncadd %s177, %s182
          %s184 = smul.addr %s25, 2
          %s185 = sadd.s32 %s27, %s184
          %s186 = smul.addr %s185, 128
          %s187 = scalar_lea.hbm %s0, %s186
          %s189 = sshll.u32 %s180, 4
          %s190 = int_to_ptr.vmem [resolvable:$true] %s189
          %192 = dma.hbm_to_vmem [thread:$0]  %s187, 128, %s190, %s177
        $region24: #{tpu_custom_call.1} parent=19 // pred_fallthru
          _
        // Predicated region
        $region25: #{tpu_custom_call.1} parent=19 // pred_check
          %p193 = pneg %p87
        $region26: #{tpu_custom_call.1} parent=19 // pred_check_branch
          %195 = sbr.rel (%p193) target = $region28
        $region27: #{tpu_custom_call.1} parent=19 // pred_region
          %s196 = sand.u32 %s77, 1
          %s197 = scalar_lea.sflag [#allocation9], %s196
          %s198 = sand.u32 %s77, 1
          %s199 = smul.addr %s198, 128
          %s200 = scalar_lea.vmem [#allocation8], %s199
          %s201 = smul.u32 16, %s27
          %s203 = ssub.s32 2048, 2048
          %204 = vsyncadd %s197, %s203
          %s205 = smul.addr %s201, 3
          %s206 = sadd.s32 %s26, %s205
          %s207 = smul.addr %s206, 128
          %s208 = scalar_lea.hbm %s1, %s207
          %s209 = sshll.u32 %s200, 4
          %s210 = int_to_ptr.vmem [resolvable:$true] %s209
          %215 = dma.hbm_to_vmem [thread:$0]  %s208, 2048, %s210, %s197, 384, 128, 8
        $region28: #{tpu_custom_call.1} parent=19 // pred_fallthru
          _
      $region20: #{tpu_custom_call.1} parent=5 // pred_fallthru
        _
      %p216 = scmp.le.s32.totalorder 1, %s18
      %p217 = scmp.lt.s32.totalorder %s18, 7
      %p218 = pnand %p216, %p217
      %p219 = pneg %p218
      // Predicated region
      $region29: #{tpu_custom_call.1} parent=5 // pred_check
        _
      $region30: #{tpu_custom_call.1} parent=5 // pred_check_branch
        %221 = sbr.rel (%p218) target = $region32
      $region31: #{tpu_custom_call.1} parent=5 // pred_region
        %s222 = ssub.s32 %s18, 1
        %s223 = sand.u32 %s52, 1
        %s224 = scalar_lea.sflag [#allocation6], %s223
        %s225 = sand.u32 %s52, 1
        %s226 = smul.addr %s225, 8
        %s227 = scalar_lea.vmem [#allocation5], %s226
        // Predicated region
        $region33: #{tpu_custom_call.1} parent=31 // pred_check
          %p228 = pneg %p65
        $region34: #{tpu_custom_call.1} parent=31 // pred_check_branch
          %230 = sbr.rel (%p228) target = $region36
        $region35: #{tpu_custom_call.1} parent=31 // pred_region
          %231 = dma.done %s224, 128
        $region36: #{tpu_custom_call.1} parent=31 // pred_fallthru
          _
        %s232 = sand.u32 %s80, 1
        %s233 = scalar_lea.sflag [#allocation9], %s232
        %s234 = sand.u32 %s80, 1
        %s235 = smul.addr %s234, 128
        %s236 = scalar_lea.vmem [#allocation8], %s235
        // Predicated region
        $region37: #{tpu_custom_call.1} parent=31 // pred_check
          %p237 = pneg %p93
        $region38: #{tpu_custom_call.1} parent=31 // pred_check_branch
          %239 = sbr.rel (%p237) target = $region40
        $region39: #{tpu_custom_call.1} parent=31 // pred_region
          %240 = dma.done %s233, 2048
        $region40: #{tpu_custom_call.1} parent=31 // pred_fallthru
          _
        %s241 = sand.u32 %s52, 1
        %s242 = scalar_lea.sflag [#allocation6], %s241
        %s243 = sand.u32 %s52, 1
        %s244 = smul.addr %s243, 8
        %s245 = scalar_lea.vmem [#allocation5], %s244
        %p246 = pneg %p65
        %p247 = pneg %p62
        %s248 = sand.u32 %s80, 1
        %s249 = scalar_lea.sflag [#allocation9], %s248
        %s250 = sand.u32 %s80, 1
        %s251 = smul.addr %s250, 128
        %s252 = scalar_lea.vmem [#allocation8], %s251
        %p253 = pneg %p93
        %p254 = pneg %p90
        %p255 = scmp.lt.s32.totalorder %s28, 0
        %s256 = scalar_select %p255, %s28, 0
        %s257 = smul.addr %s256, 8
        %s258 = scalar_lea.vmem %s2, %s257
        %p259 = pneg %p119
        %p260 = pneg %p116
        %p261 = pneg %p147
        %p262 = pneg %p144
        %s263 = sand.u32 %s134, 1
        %s264 = scalar_lea.sflag [#allocation7], %s263
        %s265 = sand.u32 %s134, 1
        %s266 = smul.addr %s265, 8
        %s267 = scalar_lea.vmem [#allocation10], %s266
        %s268 = smul.u32 16, %s30
        %p269 = scmp.lt.s32.totalorder %s28, 0
        %s270 = scalar_select %p269, %s28, 0
        %s271 = smul.addr %s270, 8
        %s272 = scalar_lea.vmem %s2, %s271
        %p273 = scmp.eq.s32.totalorder %s30, 0
        // Predicated region
        $region41: #{tpu_custom_call.1} parent=31 // pred_check
          %p274 = pneg %p273
        $region42: #{tpu_custom_call.1} parent=31 // pred_check_branch
          %276 = sbr.rel (%p274) target = $region44
        $region43: #{tpu_custom_call.1} parent=31 // pred_region
          %277 = vst [vmem:[#allocation2] sm:$0xff] 0.0
          %vm278 = vcmask 7168
          %279 = vst.msk [vmem:[#allocation3] sm:$0xff] %vm278, 0.0
          %280 = vst [vmem:[#allocation4] sm:$0x1] 0.0
        $region44: #{tpu_custom_call.1} parent=31 // pred_fallthru
          _
        %v281 = vld [vmem:[%s227] sm:$0xff]
        %v282 = vld [vmem:[%s236] sm:$0xff]
        %v283 = vld [vmem:[%s236 + $0x8] sm:$0xff]
        %v284 = vld [vmem:[%s236 + $0x10] sm:$0xff]
        %v285 = vld [vmem:[%s236 + $0x18] sm:$0xff]
        %v286 = vld [vmem:[%s236 + $0x20] sm:$0xff]
        %v287 = vld [vmem:[%s236 + $0x28] sm:$0xff]
        %v288 = vld [vmem:[%s236 + $0x30] sm:$0xff]
        %v289 = vld [vmem:[%s236 + $0x38] sm:$0xff]
        %v290 = vld [vmem:[%s236 + $0x40] sm:$0xff]
        %v291 = vld [vmem:[%s236 + $0x48] sm:$0xff]
        %v292 = vld [vmem:[%s236 + $0x50] sm:$0xff]
        %v293 = vld [vmem:[%s236 + $0x58] sm:$0xff]
        %v294 = vld [vmem:[%s236 + $0x60] sm:$0xff]
        %v295 = vld [vmem:[%s236 + $0x68] sm:$0xff]
        %v296 = vld [vmem:[%s236 + $0x70] sm:$0xff]
        %v297 = vld [vmem:[%s236 + $0x78] sm:$0xff]
        %v298 = vld [vmem:[#allocation2] sm:$0xff]
        %299 = vmatprep.subr.mxu0 0.0
        %300 = vmatpush1.msra.mxu0 %v282
        %301 = vmatprep.subr.mxu0 0.0
        %302 = vmatpush1.msra.mxu0 %v283
        %303 = vmatprep.subr.mxu0 0.0
        %304 = vmatpush1.msra.mxu0 %v284
        %305 = vmatprep.subr.mxu0 0.0
        %306 = vmatpush1.msra.mxu0 %v285
        %307 = vmatprep.subr.mxu0 0.0
        %308 = vmatpush1.msra.mxu0 %v286
        %309 = vmatprep.subr.mxu0 0.0
        %310 = vmatpush1.msra.mxu0 %v287
        %311 = vmatprep.subr.mxu0 0.0
        %312 = vmatpush1.msra.mxu0 %v288
        %313 = vmatprep.subr.mxu0 0.0
        %314 = vmatpush1.msra.mxu0 %v289
        %315 = vmatprep.subr.mxu0 0.0
        %316 = vmatpush1.msra.mxu0 %v290
        %317 = vmatprep.subr.mxu0 0.0
        %318 = vmatpush1.msra.mxu0 %v291
        %319 = vmatprep.subr.mxu0 0.0
        %320 = vmatpush1.msra.mxu0 %v292
        %321 = vmatprep.subr.mxu0 0.0
        %322 = vmatpush1.msra.mxu0 %v293
        %323 = vmatprep.subr.mxu0 0.0
        %324 = vmatpush1.msra.mxu0 %v294
        %325 = vmatprep.subr.mxu0 0.0
        %326 = vmatpush1.msra.mxu0 %v295
        %327 = vmatprep.subr.mxu0 0.0
        %328 = vmatpush1.msra.mxu0 %v296
        %329 = vmatprep.subr.mxu0 0.0
        %330 = vmatpush1.msra.mxu0 %v297
        %331 = vmatprep.subr.mxu0 0.0
        %332 = vmatpush1.msra.mxu0 0.0
        %333 = vmatprep.subr.mxu0 0.0
        %334 = vmatpush1.msra.mxu0 0.0
        %335 = vmatprep.subr.mxu0 0.0
        %336 = vmatpush1.msra.mxu0 0.0
        %337 = vmatprep.subr.mxu0 0.0
        %338 = vmatpush1.msra.mxu0 0.0
        %339 = vmatprep.subr.mxu0 0.0
        %340 = vmatpush1.msra.mxu0 0.0
        %341 = vmatprep.subr.mxu0 0.0
        %342 = vmatpush1.msra.mxu0 0.0
        %343 = vmatprep.subr.mxu0 0.0
        %344 = vmatpush1.msra.mxu0 0.0
        %345 = vmatprep.subr.mxu0 0.0
        %346 = vmatpush1.msra.mxu0 0.0
        %347 = vmatprep.subr.mxu0 0.0
        %348 = vmatpush1.msra.mxu0 0.0
        %349 = vmatprep.subr.mxu0 0.0
        %350 = vmatpush1.msra.mxu0 0.0
        %351 = vmatprep.subr.mxu0 0.0
        %352 = vmatpush1.msra.mxu0 0.0
        %353 = vmatprep.subr.mxu0 0.0
        %354 = vmatpush1.msra.mxu0 0.0
        %355 = vmatprep.subr.mxu0 0.0
        %356 = vmatpush1.msra.mxu0 0.0
        %357 = vmatprep.subr.mxu0 0.0
        %358 = vmatpush1.msra.mxu0 0.0
        %359 = vmatprep.subr.mxu0 0.0
        %360 = vmatpush1.msra.mxu0 0.0
        %361 = vmatprep.subr.mxu0 0.0
        %362 = vmatpush1.msra.mxu0 0.0
        %363 = vmatprep.mubr.f32.mxu0 0.0
        %364 = vmatmul.mubr.f32.gmra.mrb[0].mxu0 %v281
        %v365 = vpop.f32.mrb[0].mxu0
        %v366 = vadd.f32 0.0, %v365
        %v367 = vpop.f32.mrb[0].mxu0
        %368 = vdwg.mxu0
        %v369 = vadd.f32 %v298, %v366
        %370 = vst [vmem:[#allocation2] sm:$0xff] %v369
        %v371 = vld [vmem:[#allocation3] sm:$0xff]
        %v372 = vmul.f32 %v281, %v281
        %373 = vadd.xlane.f32.xlu0 %v372
        %v374 = vpop.xlane.xlu0 %373
        %v375 = vadd.f32 %v371, %v374
        %vm376 = vcmask 7168
        %377 = vst.msk [vmem:[#allocation3] sm:$0xff] %vm376, %v375
        %v378 = vld [vmem:[#allocation4] sm:$0x1]
        %v379 = vmul.f32 %v282, %v282
        %v380 = vmul.f32 %v283, %v283
        %v381 = vmul.f32 %v284, %v284
        %v382 = vmul.f32 %v285, %v285
        %v383 = vmul.f32 %v286, %v286
        %v384 = vmul.f32 %v287, %v287
        %v385 = vmul.f32 %v288, %v288
        %v386 = vmul.f32 %v289, %v289
        %v387 = vmul.f32 %v290, %v290
        %v388 = vmul.f32 %v291, %v291
        %v389 = vmul.f32 %v292, %v292
        %v390 = vmul.f32 %v293, %v293
        %v391 = vmul.f32 %v294, %v294
        %v392 = vmul.f32 %v295, %v295
        %v393 = vmul.f32 %v296, %v296
        %v394 = vmul.f32 %v297, %v297
        %v395 = vadd.f32 %v379, %v380
        %v396 = vadd.f32 %v395, %v381
        %v397 = vadd.f32 %v396, %v382
        %v398 = vadd.f32 %v397, %v383
        %v399 = vadd.f32 %v398, %v384
        %v400 = vadd.f32 %v399, %v385
        %v401 = vadd.f32 %v400, %v386
        %v402 = vadd.f32 %v401, %v387
        %v403 = vadd.f32 %v402, %v388
        %v404 = vadd.f32 %v403, %v389
        %v405 = vadd.f32 %v404, %v390
        %v406 = vadd.f32 %v405, %v391
        %v407 = vadd.f32 %v406, %v392
        %v408 = vadd.f32 %v407, %v393
        %v409 = vadd.f32 %v408, %v394
        %v410 = vrot.slane %v409, 4
        %v411 = vadd.f32 %v409, %v410
        %v412 = vrot.slane %v411, 2
        %v413 = vadd.f32 %v411, %v412
        %v414 = vrot.slane %v413, 1
        %v415 = vadd.f32 %v413, %v414
        %v416 = vadd.f32 %v378, %v415
        %417 = vst [vmem:[#allocation4] sm:$0x1] %v416
        %p418 = scmp.eq.s32.totalorder %s30, 1
        // Predicated region
        $region45: #{tpu_custom_call.1} parent=31 // pred_check
          %p419 = pneg %p418
        $region46: #{tpu_custom_call.1} parent=31 // pred_check_branch
          %421 = sbr.rel (%p419) target = $region48
        $region47: #{tpu_custom_call.1} parent=31 // pred_region
          %v422 = vld [vmem:[#allocation3] sm:$0xff]
          %v423 = vmax.f32 %v422, 1e-24
          %v424 = vrsqrt.pop %v423
          %v425 = vld [vmem:[#allocation4] sm:$0x1]
          %v426 = vmax.f32 %v425, 1e-24
          %v427 = vrsqrt.pop %v426
          %v428 = vld [vmem:[#allocation2] sm:$0xff]
          %430 = vset.pattern.permute.xlu0 0
          %431 = vperm.xlu0 %430, %v424
          %v432 = vpop.permute.xlu0 %431
          %v434 = vmul.f32 %v428, %v432
          %v436 = vlaneseq
          %v437 = vshrl.u32 %v436, 7
          %v438 = vsub.s32 0, %v437
          %v439 = vrot.slane %v427, %v438
          %v441 = vmul.f32 %v434, %v439
          %v442 = vld [vmem:[%s272] sm:$0xff]
          %s443 = smul.u32 %s29, 128
          %v444 = vlaneseq
          %v445 = vand.u32 %v444, 127
          %v446 = vstv %s443
          %v447 = vadd.s32 %v446, %v445
          %448 = vset.pattern.permute.xlu0 0
          %449 = vperm.xlu0 %448, %v442
          %v450 = vpop.permute.xlu0 %449
          %vm451 = vcmp.eq.s32.totalorder %v447, %v450
          %v452 = vsel %vm451, 1, 0
          %v453 = vcvt.s32.f32 %v452
          %v454 = vmul.f32 %v441, 64.0
          %v455 = vmul.f32 %v453, 22.4
          %v456 = vsub.f32 %v454, %v455
          %457 = vst [vmem:[%s267] sm:$0xff] %v456
        $region48: #{tpu_custom_call.1} parent=31 // pred_fallthru
          _
        %s458 = sand.u32 %s134, 1
        %s459 = scalar_lea.sflag [#allocation7], %s458
        %s460 = sand.u32 %s134, 1
        %s461 = smul.addr %s460, 8
        %s462 = scalar_lea.vmem [#allocation10], %s461
        // Predicated region
        $region49: #{tpu_custom_call.1} parent=31 // pred_check
          %p463 = pneg %p144
        $region50: #{tpu_custom_call.1} parent=31 // pred_check_branch
          %465 = sbr.rel (%p463) target = $region52
        $region51: #{tpu_custom_call.1} parent=31 // pred_region
          %s467 = ssub.s32 128, 128
          %468 = vsyncadd %s459, %s467
          %s469 = smul.addr %s28, 3
          %s470 = sadd.s32 %s29, %s469
          %s471 = smul.addr %s470, 128
          %s472 = scalar_lea.hbm %s3, %s471
          %s474 = sshll.u32 %s462, 4
          %s475 = int_to_ptr.vmem [resolvable:$true] %s474
          %477 = dma.vmem_to_hbm [thread:$0]  %s475, 128, %s472, %s459
        $region52: #{tpu_custom_call.1} parent=31 // pred_fallthru
          _
      $region32: #{tpu_custom_call.1} parent=5 // pred_fallthru
        _
      %p478 = scmp.le.s32.totalorder 2, %s18
      // Predicated region
      $region53: #{tpu_custom_call.1} parent=5 // pred_check
        %p479 = pneg %p478
      $region54: #{tpu_custom_call.1} parent=5 // pred_check_branch
        %481 = sbr.rel (%p479) target = $region56
      $region55: #{tpu_custom_call.1} parent=5 // pred_region
        %s482 = ssub.s32 %s18, 2
        // Predicated region
        $region57: #{tpu_custom_call.1} parent=55 // pred_check
          %p483 = pneg %p150
        $region58: #{tpu_custom_call.1} parent=55 // pred_check_branch
          %485 = sbr.rel (%p483) target = $region60
        $region59: #{tpu_custom_call.1} parent=55 // pred_region
          %s486 = sand.u32 %s135, 1
          %s487 = scalar_lea.sflag [#allocation7], %s486
          %s488 = sand.u32 %s135, 1
          %s489 = smul.addr %s488, 8
          %s490 = scalar_lea.vmem [#allocation10], %s489
          %491 = dma.done %s487, 128
        $region60: #{tpu_custom_call.1} parent=55 // pred_fallthru
          _
      $region56: #{tpu_custom_call.1} parent=5 // pred_fallthru
        _
    $region6: #{tpu_custom_call.1} parent=1 // loop_footer
      %s22 = sadd.s32 1, %s18
    $region7: #{tpu_custom_call.1} parent=1 // loop_footer_branch
      %17 = sbr.rel target = $region3
    $region8: #{tpu_custom_call.1} parent=1 // loop_exit
      _
    %492 = vsyncpa [#allocation6], 1
    %s493 = scalar_lea.sflag [#allocation6], 1
    %494 = vsyncpa %s493, 1
    %495 = vsyncpa [#allocation9], 1
    %s496 = scalar_lea.sflag [#allocation9], 1
    %497 = vsyncpa %s496, 1
    %498 = vsyncpa [#allocation7], 1
    %s499 = scalar_lea.sflag [#allocation7], 1
    %500 = vsyncpa %s499, 1

</llo_original>
